<compile_context>
chip_gen: v7x
topology: tpu7x:2x2x1
jax: 0.10.0
libtpu: 0.0.40
codegen_flags: <defaults>
</compile_context>

<pallas_src>
import functools

import numpy as np
import jax
import jax.numpy as jnp
from jax import lax
from jax.experimental import pallas as pl
from jax.experimental.pallas import tpu as pltpu


# ----------------------------------------------------------------------------
# Trace-time construction of the (data-independent) Kalman filter matrix
# ----------------------------------------------------------------------------
def _kalman_weight_matrix(L, obs_cov, trans_cov, dtype):
    """Lower-triangular W such that trend[t] = sum_s W[t, s] * y[s].

    Derived from the local-level forward filter:
        m_0 = y_0
        m_t = (1 - k_t) * m_{t-1} + k_t * y_t ,  t >= 1
    where the gains k_t come from the covariance recursion and are independent
    of the observed data, so the whole filter collapses to a fixed matrix.
    """
    obs_cov = float(obs_cov)
    trans_cov = float(trans_cov)
    W = np.zeros((L, L), dtype=np.float64)
    W[0, 0] = 1.0                       # m_0 = y_0 (zero first innovation)
    p = 1.0                             # initial state covariance
    k0 = p / (p + obs_cov)
    p = (1.0 - k0) * p                  # filtered covariance after t = 0
    for t in range(1, L):
        p_pred = p + trans_cov
        k = p_pred / (p_pred + obs_cov)
        W[t, :t] = (1.0 - k) * W[t - 1, :t]
        W[t, t] = k
        p = (1.0 - k) * p_pred
    return jnp.asarray(W, dtype=dtype)


# ----------------------------------------------------------------------------
# Pallas kernel: trend = W_rows @ y_full (MXU), residual = y_rows - trend (VPU)
# ----------------------------------------------------------------------------
def _kalman_kernel(w_ref, yfull_ref, yblk_ref, trend_ref, resid_ref):
    w = w_ref[...]                                       # [tm, L] compute dtype
    y = yfull_ref[...].astype(w_ref.dtype)               # [L, tn] cast for MXU
    trend = jnp.dot(w, y, preferred_element_type=jnp.float32)   # [tm, tn] f32
    trend_ref[...] = trend.astype(trend_ref.dtype)
    resid_ref[...] = (yblk_ref[...].astype(jnp.float32) - trend
                      ).astype(resid_ref.dtype)


def kalman_decomposition(obs, obs_cov=1.0, trans_cov=1.0, *,
                         compute_dtype=jnp.bfloat16,
                         tile_m=256, tile_n=256,
                         use_pallas=True):
    """obs: [B, L, C] -> (trend, residual), both [B, L, C]."""
    B, L, C = obs.shape
    N = B * C
    w = _kalman_weight_matrix(L, obs_cov, trans_cov, compute_dtype)

    # Fold batch & channels into a lane-dense [L, N] slab (layout plumbing).
    y2d = jnp.transpose(obs, (1, 0, 2)).reshape(L, N)

    if not use_pallas:
        # XLA fallback: for tiny problems the pallas_call launch overhead
        # exceeds the fused einsum cost.
        trend2d_f32 = jnp.dot(w, y2d.astype(compute_dtype),
                              preferred_element_type=jnp.float32)
        trend2d = trend2d_f32.astype(obs.dtype)
        resid2d = (y2d.astype(jnp.float32) - trend2d_f32).astype(obs.dtype)
    else:
        # Block shapes: full extent when the dim is small (always legal),
        # otherwise multiples of (8, 128).
        tm = L if L <= tile_m else tile_m
        tn = N if N <= tile_n else tile_n
        grid = (pl.cdiv(L, tm), pl.cdiv(N, tn))   # (rows of W, lane tiles)

        out_sds = jax.ShapeDtypeStruct((L, N), obs.dtype)
        out_spec = pl.BlockSpec((tm, tn), lambda m, n: (m, n))

        trend2d, resid2d = pl.pallas_call(
            _kalman_kernel,
            out_shape=(out_sds, out_sds),
            grid=grid,
            in_specs=[
                # W rows for this m-tile; constant along n -> VMEM-resident.
                pl.BlockSpec((tm, L), lambda m, n: (m, 0)),
                # Full-column observation slab for the matmul operand.
                pl.BlockSpec((L, tn), lambda m, n: (0, n)),
                # Row-matched observation tile for the fused residual.
                pl.BlockSpec((tm, tn), lambda m, n: (m, n)),
            ],
            out_specs=(out_spec, out_spec),
            compiler_params=pltpu.CompilerParams(
                dimension_semantics=("parallel", "parallel"),  # v7x: 2 TCs
                vmem_limit_bytes=48 * 1024 * 1024,
            ),
        )(w, y2d, y2d)

    trend = jnp.transpose(trend2d.reshape(L, B, C), (1, 0, 2))
    resid = jnp.transpose(resid2d.reshape(L, B, C), (1, 0, 2))
    return trend, resid


# ----------------------------------------------------------------------------
# Pure-JAX sequential reference (for numerical verification only)
# ----------------------------------------------------------------------------
def _kalman_reference(obs, obs_cov, trans_cov):
    y = jnp.transpose(obs, (1, 0, 2)).astype(jnp.float32)    # [L, B, C]
    obs_cov = jnp.float32(obs_cov)
    trans_cov = jnp.float32(trans_cov)
    p0 = jnp.float32(1.0)
    k0 = p0 / (p0 + obs_cov)
    p_filt = (jnp.float32(1.0) - k0) * p0
    m0 = y[0]

    def step(carry, yt):
        m, p = carry
        p_pred = p + trans_cov
        k = p_pred / (p_pred + obs_cov)
        m_new = m + k * (yt - m)
        p_new = (jnp.float32(1.0) - k) * p_pred
        return (m_new, p_new), m_new

    (_, _), ms = lax.scan(step, (m0, p_filt), y[1:])
    trend = jnp.concatenate([m0[None], ms], axis=0)          # [L, B, C]
    trend = jnp.transpose(trend, (1, 0, 2)).astype(obs.dtype)
    return trend, obs - trend


# ----------------------------------------------------------------------------
if __name__ == "__main__":
    B, L, C = 2, 16, 4            # obs: [batch, seq_len, channels]
    obs_cov, trans_cov = 1.0, 1.0

    key = jax.random.PRNGKey(0)
    obs = jax.random.normal(key, (B, L, C), jnp.float32)

    t_ref, r_ref = _kalman_reference(obs, obs_cov, trans_cov)

    # 1) Exact-math check: f32 compute path vs the sequential reference.
    fwd_f32 = jax.jit(functools.partial(
        kalman_decomposition, obs_cov=obs_cov, trans_cov=trans_cov,
        compute_dtype=jnp.float32))
    t32, r32 = jax.block_until_ready(fwd_f32(obs))
    np.testing.assert_allclose(np.asarray(t32), np.asarray(t_ref),
                               rtol=1e-4, atol=1e-4)
    np.testing.assert_allclose(np.asarray(r32), np.asarray(r_ref),
                               rtol=1e-4, atol=1e-4)

    # 2) Default fast path: bf16 MXU inputs, f32 accumulation.
    fwd = jax.jit(functools.partial(
        kalman_decomposition, obs_cov=obs_cov, trans_cov=trans_cov))
    trend, resid = jax.block_until_ready(fwd(obs))
    np.testing.assert_allclose(np.asarray(trend), np.asarray(t_ref),
                               rtol=5e-2, atol=5e-2)
    np.testing.assert_allclose(np.asarray(resid), np.asarray(r_ref),
                               rtol=5e-2, atol=5e-2)

    # 3) Tiny-shape XLA fallback (dispatch option) sanity check.
    fwd_xla = jax.jit(functools.partial(
        kalman_decomposition, obs_cov=obs_cov, trans_cov=trans_cov,
        use_pallas=False))
    t_x, r_x = jax.block_until_ready(fwd_xla(obs))
    np.testing.assert_allclose(np.asarray(t_x), np.asarray(t_ref),
                               rtol=5e-2, atol=5e-2)
    np.testing.assert_allclose(np.asarray(r_x), np.asarray(r_ref),
                               rtol=5e-2, atol=5e-2)

    assert trend.shape == (B, L, C) and resid.shape == (B, L, C)
    assert bool(jnp.all(jnp.isfinite(trend)))
    assert bool(jnp.all(jnp.isfinite(resid)))
    print("KERNEL_OK")
</pallas_src>

<mosaic_0001>
module attributes {stable_mosaic.version = 11 : i64} {
  func.func @_kalman_kernel(%arg0: i32, %arg1: i32, %arg2: memref<16x16xf32, #tpu.memory_space<vmem>>, %arg3: memref<16x8xf32, #tpu.memory_space<vmem>>, %arg4: memref<16x8xf32, #tpu.memory_space<vmem>>, %arg5: memref<16x8xf32, #tpu.memory_space<vmem>>, %arg6: memref<16x8xf32, #tpu.memory_space<vmem>>) attributes {dimension_semantics = [#tpu.dimension_semantics<parallel>, #tpu.dimension_semantics<parallel>], iteration_bounds = array<i64: 1, 1>, scalar_prefetch = 0 : i64, scratch_operands = 0 : i64, tpu.core_type = #tpu.core_type<tc>, window_params = [{transform_indices = @transform_0, window_bounds = array<i64: 16, 16>}, {transform_indices = @transform_1, window_bounds = array<i64: 16, 8>}, {transform_indices = @transform_2, window_bounds = array<i64: 16, 8>}, {transform_indices = @transform_3, window_bounds = array<i64: 16, 8>}, {transform_indices = @transform_4, window_bounds = array<i64: 16, 8>}]} {
    %c0 = arith.constant 0 : index
    %c0_0 = arith.constant 0 : index
    %0 = vector.load %arg2[%c0, %c0_0] : memref<16x16xf32, #tpu.memory_space<vmem>>, vector<16x16xf32>
    %c0_1 = arith.constant 0 : index
    %c0_2 = arith.constant 0 : index
    %1 = vector.load %arg3[%c0_1, %c0_2] : memref<16x8xf32, #tpu.memory_space<vmem>>, vector<16x8xf32>
    %cst = arith.constant dense<0.000000e+00> : vector<16x8xf32>
    %2 = tpu.matmul %0, %1, %cst {dimension_numbers = #tpu.dot_dimension_numbers<[1], [0], [0], [1], [0, 0, 1, 1], [], []>} : vector<16x16xf32>, vector<16x8xf32>, vector<16x8xf32> -> vector<16x8xf32>
    %c0_3 = arith.constant 0 : index
    %c0_4 = arith.constant 0 : index
    %3 = vector.load %arg5[%c0_3, %c0_4] : memref<16x8xf32, #tpu.memory_space<vmem>>, vector<16x8xf32>
    tpu.vector_store %arg5[%c0_3, %c0_4], %2 {strides = array<i32>} : memref<16x8xf32, #tpu.memory_space<vmem>>, vector<16x8xf32>,
    %c0_5 = arith.constant 0 : index
    %c0_6 = arith.constant 0 : index
    %4 = vector.load %arg4[%c0_5, %c0_6] : memref<16x8xf32, #tpu.memory_space<vmem>>, vector<16x8xf32>
    %5 = arith.subf %4, %2 : vector<16x8xf32>
    %c0_7 = arith.constant 0 : index
    %c0_8 = arith.constant 0 : index
    %6 = vector.load %arg6[%c0_7, %c0_8] : memref<16x8xf32, #tpu.memory_space<vmem>>, vector<16x8xf32>
    tpu.vector_store %arg6[%c0_7, %c0_8], %5 {strides = array<i32>} : memref<16x8xf32, #tpu.memory_space<vmem>>, vector<16x8xf32>,
    return
  }
  func.func @transform_0(%arg0: i32, %arg1: i32) -> (i32, i32) {
    %c0_i32 = arith.constant 0 : i32
    %c0_i32_0 = arith.constant 0 : i32
    return %arg0, %c0_i32 : i32, i32
  }
  func.func @transform_1(%arg0: i32, %arg1: i32) -> (i32, i32) {
    %c0_i32 = arith.constant 0 : i32
    %c0_i32_0 = arith.constant 0 : i32
    return %c0_i32, %arg1 : i32, i32
  }
  func.func @transform_2(%arg0: i32, %arg1: i32) -> (i32, i32) {
    %c0_i32 = arith.constant 0 : i32
    return %arg0, %arg1 : i32, i32
  }
  func.func @transform_3(%arg0: i32, %arg1: i32) -> (i32, i32) {
    %c0_i32 = arith.constant 0 : i32
    return %arg0, %arg1 : i32, i32
  }
  func.func @transform_4(%arg0: i32, %arg1: i32) -> (i32, i32) {
    %c0_i32 = arith.constant 0 : i32
    return %arg0, %arg1 : i32, i32
  }
}

</mosaic_0001>

<llo_original>
// kernel: kalman_decomposition.1
$region0: #{kalman_decomposition.1}
  #allocation0 [shape = 'u32[]', space=smem, size = 0x4, offset = 0x4, fixed_abs, tag = 'smem constant byte address 0x4 - core index']
  #allocation1 [shape = 'u32[144,128]{1,0:T(1,128)}', space=vmem, size = 0x12000, scoped, tag = 'internal scratch']
  %s0 = inlined_call_operand.vmem [shape: f32[16,16], index: 0, kind: input, shape index: {}]
  %s1 = inlined_call_operand.vmem [shape: f32[16,8], index: 1, kind: input, shape index: {}, may-alias: {1,2}]
  %s2 = inlined_call_operand.vmem [shape: f32[16,8], index: 2, kind: input, shape index: {}, may-alias: {1,2}]
  %s3 = inlined_call_operand.vmem [shape: f32[16,8], index: 3, kind: output, shape index: {0}]
  %s4 = inlined_call_operand.vmem [shape: f32[16,8], index: 4, kind: output, shape index: {1}]
  %5 = xla_tuple %s3, %s4
  %s6 = sld [smem:[#allocation0]]
  $region30: #{kalman_decomposition.1} parent=0
    _
  %s8 = ssub.s32 1, %s6
  %s9 = scalar_select 0, %s8, %s6
  // Predicated region
  $region2: #{kalman_decomposition.1} parent=0 // pred_check
    _
  $region3: #{kalman_decomposition.1} parent=0 // pred_check_branch
    %11 = sbr.rel (0) target = $region5
  $region4: #{kalman_decomposition.1} parent=0 // pred_region
    _
  $region5: #{kalman_decomposition.1} parent=0 // pred_fallthru
    _
  // Predicated region
  $region6: #{kalman_decomposition.1} parent=0 // pred_check
    _
  $region7: #{kalman_decomposition.1} parent=0 // pred_check_branch
    %13 = sbr.rel (0) target = $region9
  $region8: #{kalman_decomposition.1} parent=0 // pred_region
    _
  $region9: #{kalman_decomposition.1} parent=0 // pred_fallthru
    _
  // Predicated region
  $region10: #{kalman_decomposition.1} parent=0 // pred_check
    _
  $region11: #{kalman_decomposition.1} parent=0 // pred_check_branch
    %15 = sbr.rel (0) target = $region13
  $region12: #{kalman_decomposition.1} parent=0 // pred_region
    _
  $region13: #{kalman_decomposition.1} parent=0 // pred_fallthru
    _
  %v16 = vld [vmem:[%s0] sm:$0xff]
  %v17 = vld [vmem:[%s0 + $0x8] sm:$0xff]
  %v18 = vld [vmem:[%s1] sm:$0xff]
  %v19 = vld [vmem:[%s1 + $0x8] sm:$0xff]
  %vm20 = vcmask 130048
  %v22 = vsel %vm20, %v16, 0
  %v25 = vsel %vm20, %v17, 0
  %27 = vmatprep.subr.mxu0 0.0
  %28 = vmatpush1.msra.mxu0 %v18
  %29 = vmatprep.subr.mxu0 0.0
  %30 = vmatpush1.msra.mxu0 %v19
  %31 = vmatprep.subr.mxu0 0.0
  %32 = vmatpush1.msra.mxu0 0.0
  %33 = vmatprep.subr.mxu0 0.0
  %34 = vmatpush1.msra.mxu0 0.0
  %35 = vmatprep.subr.mxu0 0.0
  %36 = vmatpush1.msra.mxu0 0.0
  %37 = vmatprep.subr.mxu0 0.0
  %38 = vmatpush1.msra.mxu0 0.0
  %39 = vmatprep.subr.mxu0 0.0
  %40 = vmatpush1.msra.mxu0 0.0
  %41 = vmatprep.subr.mxu0 0.0
  %42 = vmatpush1.msra.mxu0 0.0
  %43 = vmatprep.subr.mxu0 0.0
  %44 = vmatpush1.msra.mxu0 0.0
  %45 = vmatprep.subr.mxu0 0.0
  %46 = vmatpush1.msra.mxu0 0.0
  %47 = vmatprep.subr.mxu0 0.0
  %48 = vmatpush1.msra.mxu0 0.0
  %49 = vmatprep.subr.mxu0 0.0
  %50 = vmatpush1.msra.mxu0 0.0
  %51 = vmatprep.subr.mxu0 0.0
  %52 = vmatpush1.msra.mxu0 0.0
  %53 = vmatprep.subr.mxu0 0.0
  %54 = vmatpush1.msra.mxu0 0.0
  %55 = vmatprep.subr.mxu0 0.0
  %56 = vmatpush1.msra.mxu0 0.0
  %57 = vmatprep.subr.mxu0 0.0
  %58 = vmatpush1.msra.mxu0 0.0
  %59 = vmatprep.subr.mxu0 0.0
  %60 = vmatpush1.msra.mxu0 0.0
  %61 = vmatprep.subr.mxu0 0.0
  %62 = vmatpush1.msra.mxu0 0.0
  %63 = vmatprep.subr.mxu0 0.0
  %64 = vmatpush1.msra.mxu0 0.0
  %65 = vmatprep.subr.mxu0 0.0
  %66 = vmatpush1.msra.mxu0 0.0
  %67 = vmatprep.subr.mxu0 0.0
  %68 = vmatpush1.msra.mxu0 0.0
  %69 = vmatprep.subr.mxu0 0.0
  %70 = vmatpush1.msra.mxu0 0.0
  %71 = vmatprep.subr.mxu0 0.0
  %72 = vmatpush1.msra.mxu0 0.0
  %73 = vmatprep.subr.mxu0 0.0
  %74 = vmatpush1.msra.mxu0 0.0
  %75 = vmatprep.subr.mxu0 0.0
  %76 = vmatpush1.msra.mxu0 0.0
  %77 = vmatprep.subr.mxu0 0.0
  %78 = vmatpush1.msra.mxu0 0.0
  %79 = vmatprep.subr.mxu0 0.0
  %80 = vmatpush1.msra.mxu0 0.0
  %81 = vmatprep.subr.mxu0 0.0
  %82 = vmatpush1.msra.mxu0 0.0
  %83 = vmatprep.subr.mxu0 0.0
  %84 = vmatpush1.msra.mxu0 0.0
  %85 = vmatprep.subr.mxu0 0.0
  %86 = vmatpush1.msra.mxu0 0.0
  %87 = vmatprep.subr.mxu0 0.0
  %88 = vmatpush1.msra.mxu0 0.0
  %89 = vmatprep.subr.mxu0 0.0
  %90 = vmatpush1.msra.mxu0 0.0
  %91 = vmatprep.mubr.f32.mxu0 0.0
  %92 = vmatmul.mubr.f32.gmra.mrb[0].mxu0 %v22
  %v93 = vpop.f32.mrb[0].mxu0
  %v94 = vadd.f32 0.0, %v93
  %v95 = vpop.f32.mrb[0].mxu0
  %96 = vmatprep.mubr.f32.mxu0 0.0
  %97 = vmatmul.mubr.f32.gmra.mrb[0].mxu0 %v25
  %v98 = vpop.f32.mrb[0].mxu0
  %v99 = vadd.f32 0.0, %v98
  %v100 = vpop.f32.mrb[0].mxu0
  %101 = vdwg.mxu0
  %vm102 = vcmask 64512
  %103 = vst.msk [vmem:[%s3] sm:$0xff] %vm102, %v94
  %104 = vst.msk [vmem:[%s3 + $0x8] sm:$0xff] %vm102, %v99
  %v105 = vld [vmem:[%s2] sm:$0xff]
  %v106 = vld [vmem:[%s2 + $0x8] sm:$0xff]
  %v107 = vsub.f32 %v105, %v94
  %v108 = vsub.f32 %v106, %v99
  %109 = vst.msk [vmem:[%s4] sm:$0xff] %vm102, %v107
  %110 = vst.msk [vmem:[%s4 + $0x8] sm:$0xff] %vm102, %v108
  // Predicated region
  $region14: #{kalman_decomposition.1} parent=0 // pred_check
    _
  $region15: #{kalman_decomposition.1} parent=0 // pred_check_branch
    %112 = sbr.rel (0) target = $region17
  $region16: #{kalman_decomposition.1} parent=0 // pred_region
    _
  $region17: #{kalman_decomposition.1} parent=0 // pred_fallthru
    _
  // Predicated region
  $region18: #{kalman_decomposition.1} parent=0 // pred_check
    _
  $region19: #{kalman_decomposition.1} parent=0 // pred_check_branch
    %114 = sbr.rel (0) target = $region21
  $region20: #{kalman_decomposition.1} parent=0 // pred_region
    _
  $region21: #{kalman_decomposition.1} parent=0 // pred_fallthru
    _
  // Predicated region
  $region22: #{kalman_decomposition.1} parent=0 // pred_check
    _
  $region23: #{kalman_decomposition.1} parent=0 // pred_check_branch
    %116 = sbr.rel (0) target = $region25
  $region24: #{kalman_decomposition.1} parent=0 // pred_region
    _
  $region25: #{kalman_decomposition.1} parent=0 // pred_fallthru
    _
  // Predicated region
  $region26: #{kalman_decomposition.1} parent=0 // pred_check
    _
  $region27: #{kalman_decomposition.1} parent=0 // pred_check_branch
    %118 = sbr.rel (0) target = $region29
  $region28: #{kalman_decomposition.1} parent=0 // pred_region
    _
  $region29: #{kalman_decomposition.1} parent=0 // pred_fallthru
    _

</llo_original>
